<compile_context>
chip_gen: v7x
topology: tpu7x:2x2x1
jax: 0.10.0
libtpu: 0.0.40
codegen_flags: <defaults>
</compile_context>

<pallas_src>
import functools

import jax
import jax.numpy as jnp
from jax.experimental import pallas as pl
from jax.experimental.pallas import tpu as pltpu

_HIGH = jax.lax.Precision.HIGHEST   # only used in tiny XLA-side folding / reference
_EPS = 1e-5                         # torch InstanceNorm1d default


# ---------------------------------------------------------------------------
# HW-tiled fused attention kernel: one (batch, hw_tile) step per grid point.
# ---------------------------------------------------------------------------
def _attention_hw_tile_kernel(x_ref, a_ref, sbias_ref, w1v_ref, b1_ref,
                              y_ref, pool_ref, ysum_ref, ysq_ref,
                              *, num_heads, n_l, hw_true, padded):
    f32 = jnp.float32
    t = pl.program_id(1)
    tile = x_ref.shape[-1]

    # Per-batch accumulators live in the resident output blocks (index map is
    # constant along the "arbitrary" HW axis); initialise them on the first tile.
    @pl.when(t == 0)
    def _init():
        pool_ref[0] = jnp.zeros(pool_ref.shape[1:], pool_ref.dtype)
        ysum_ref[0] = jnp.zeros(ysum_ref.shape[1:], ysum_ref.dtype)
        ysq_ref[0] = jnp.zeros(ysq_ref.shape[1:], ysq_ref.dtype)

    # All-head scores in ONE bf16 MXU matmul (Wq, 1/sqrt(Kc), the f_query
    # InstanceNorm and the language mask are folded into `a` / `sbias`).
    s = jnp.dot(a_ref[0], x_ref[0], preferred_element_type=f32) + sbias_ref[0]

    # Per-head softmax over the n_l tokens via a (num_heads, n_l, tile) view.
    s3 = s.reshape(num_heads, n_l, tile)
    s3 = s3 - jnp.max(s3, axis=1, keepdims=True)
    e = jnp.exp(s3)
    # Exact reciprocal: P feeds the pooled-probability path, which is NOT
    # re-normalised downstream (review correctness concern).
    p = e * pl.reciprocal(jnp.sum(e, axis=1, keepdims=True), approx=False)
    p = p.reshape(num_heads * n_l, tile)

    if padded:  # trace-time flag: zero out padded HW columns (pool + out matmul)
        col = t * tile + jax.lax.broadcasted_iota(jnp.int32, (1, tile), 1)
        p = p * (col < hw_true).astype(f32)

    # AdaptiveAvgPool over HW: XLU lane reduction of f32 P, accumulated in f32.
    pool_ref[0] += jnp.sum(p, axis=1, keepdims=True)

    # out projection: W1 folded through the block-diagonal value matrix at trace
    # time -> a single bf16 matmul with contraction num_heads * n_l.
    y = jnp.dot(w1v_ref[0], p.astype(w1v_ref.dtype),
                preferred_element_type=f32) + b1_ref[...]
    y_ref[0] = y.astype(y_ref.dtype)

    # One-pass InstanceNorm stats for the W1 output (finalised outside).
    ysum_ref[0] += jnp.sum(y, axis=1, keepdims=True)
    ysq_ref[0] += jnp.sum(y * y, axis=1, keepdims=True)


def _vmem_limit_bytes(C, out_ch, nhn, tile):
    bf2, f4 = 2, 4
    inputs = 2 * (C * tile * bf2)                                   # x tile (dbl-buf)
    resident = 2 * (nhn * C * bf2 + nhn * f4 + out_ch * nhn * bf2 + out_ch * f4)
    outputs = 2 * (out_ch * tile * f4) + 2 * (nhn * f4 + 2 * out_ch * f4)
    temps = 6 * max(nhn, out_ch) * tile * f4                        # s/e/p/y live values
    est = inputs + resident + outputs + temps
    return int(min(max(2 * est, 16 * 1024 * 1024), 100 * 1024 * 1024))


# ---------------------------------------------------------------------------
# Module forward: trace-time folding + one HW-tiled pallas_call + tiny XLA tail.
# ---------------------------------------------------------------------------
def spatial_image_language_attention(params, x, l, l_mask, emb, *,
                                     key_channels, value_channels, num_heads,
                                     hw_tile=512):
    f32, bf16 = jnp.float32, jnp.bfloat16
    B, C, H, W = x.shape
    HW = H * W
    n_l = l.shape[-1]
    Kc, Vc, NH = key_channels, value_channels, num_heads
    Dk, Dv = Kc // NH, Vc // NH
    nhn = NH * n_l

    x2 = x.reshape(B, C, HW).astype(f32)
    lf = l.astype(f32)
    m_row = jnp.transpose(l_mask.astype(f32), (0, 2, 1))            # (B, 1, n_l)

    wq = params['f_query_w'][:, :, 0].astype(f32); bq = params['f_query_b'].astype(f32)
    wk = params['f_key_w'][:, :, 0].astype(f32); bk = params['f_key_b'].astype(f32)
    wv = params['f_value_w'][:, :, 0].astype(f32); bv = params['f_value_b'].astype(f32)
    wv2 = params['f_value2_w'][:, :, 0].astype(f32); bv2 = params['f_value2_b'].astype(f32)
    w1 = params['W1_w'][:, :, 0].astype(f32); b1 = params['W1_b'].astype(f32)
    w2 = params['W2_w'][:, :, 0].astype(f32); b2 = params['W2_b'].astype(f32)
    w3 = params['W3_w'][:, :, 0].astype(f32); b3 = params['W3_b'].astype(f32)
    wpe = params['proj_emb_w'][:, :, 0].astype(f32); bpe = params['proj_emb_b'].astype(f32)
    out_ch = w1.shape[0]
    scale = float(Kc) ** (-0.5)

    # --- f_query InstanceNorm stats analytically from x moments (CxC Gram) -----
    xm = jnp.mean(x2, axis=-1)                                      # (B, C)
    xg = jnp.einsum('bct,bdt->bcd', x2, x2, precision=_HIGH) / HW   # (B, C, C)
    wqxm = jnp.einsum('kc,bc->bk', wq, xm, precision=_HIGH)
    qmean = wqxm + bq[None]
    q2 = jnp.einsum('bcd,kc,kd->bk', xg, wq, wq, precision=_HIGH)
    qmom2 = q2 + 2.0 * wqxm * bq[None] + (bq ** 2)[None]
    qvar = jnp.maximum(qmom2 - qmean ** 2, 0.0)
    istd = jax.lax.rsqrt(qvar + _EPS)                               # (B, Kc)

    # --- tiny masked language-side projections (plain JAX) --------------------
    key = (jnp.einsum('kc,bcn->bkn', wk, lf, precision=_HIGH) + bk[None, :, None]) * m_row
    value = (jnp.einsum('kc,bcn->bkn', wv, lf, precision=_HIGH) + bv[None, :, None]) * m_row
    value2 = (jnp.einsum('kc,bcn->bkn', wv2, lf, precision=_HIGH) + bv2[None, :, None]) * m_row

    # --- fold 1/sqrt(Kc) + query InstanceNorm + Wq into the key side ----------
    k_eff = key * (istd * scale)[:, :, None]                        # (B, Kc, n_l)
    k_eff_h = k_eff.reshape(B, NH, Dk, n_l)
    wq_h = wq.reshape(NH, Dk, C)
    a_all = jnp.einsum('bhdn,hdc->bhnc', k_eff_h, wq_h,
                       precision=_HIGH).reshape(B, nhn, C)          # stacked scores op
    qoff = (bq[None] - qmean).reshape(B, NH, Dk)
    sbias = jnp.einsum('bhdn,bhd->bhn', k_eff_h, qoff, precision=_HIGH)
    sbias = sbias + (10000.0 * m_row - 10000.0)                     # additive lang. mask
    sbias = sbias.reshape(B, nhn, 1)

    # --- fold W1 through the block-diagonal per-head value matrix -------------
    w1_h = w1.reshape(out_ch, NH, Dv)
    v_h = value.reshape(B, NH, Dv, n_l)
    w1v = jnp.einsum('ohd,bhdn->bohn', w1_h, v_h,
                     precision=_HIGH).reshape(B, out_ch, nhn)

    # --- HW tiling: lane-dense, multiple of 128 --------------------------------
    tile = max(128, (min(hw_tile, max(HW, 1)) // 128) * 128)
    n_t = -(-HW // tile)
    hw_pad = n_t * tile
    pad = hw_pad - HW
    x_pad = jnp.pad(x2, ((0, 0), (0, 0), (0, pad))) if pad else x2
    x_bf = x_pad.astype(bf16)
    a_bf = a_all.astype(bf16)
    w1v_bf = w1v.astype(bf16)
    b1_col = b1.reshape(out_ch, 1)

    kern = functools.partial(_attention_hw_tile_kernel, num_heads=NH, n_l=n_l,
                             hw_true=HW, padded=pad > 0)

    y_raw, pool_sum, ysum, ysq = pl.pallas_call(
        kern,
        out_shape=(
            jax.ShapeDtypeStruct((B, out_ch, hw_pad), f32),
            jax.ShapeDtypeStruct((B, nhn, 1), f32),
            jax.ShapeDtypeStruct((B, out_ch, 1), f32),
            jax.ShapeDtypeStruct((B, out_ch, 1), f32),
        ),
        grid=(B, n_t),
        in_specs=[
            pl.BlockSpec((1, C, tile), lambda b, t: (b, 0, t)),
            pl.BlockSpec((1, nhn, C), lambda b, t: (b, 0, 0)),
            pl.BlockSpec((1, nhn, 1), lambda b, t: (b, 0, 0)),
            pl.BlockSpec((1, out_ch, nhn), lambda b, t: (b, 0, 0)),
            pl.BlockSpec((out_ch, 1), lambda b, t: (0, 0)),
        ],
        out_specs=(
            pl.BlockSpec((1, out_ch, tile), lambda b, t: (b, 0, t)),
            pl.BlockSpec((1, nhn, 1), lambda b, t: (b, 0, 0)),
            pl.BlockSpec((1, out_ch, 1), lambda b, t: (b, 0, 0)),
            pl.BlockSpec((1, out_ch, 1), lambda b, t: (b, 0, 0)),
        ),
        compiler_params=pltpu.CompilerParams(
            dimension_semantics=("parallel", "arbitrary"),
            vmem_limit_bytes=_vmem_limit_bytes(C, out_ch, nhn, tile),
        ),
    )(x_bf, a_bf, sbias, w1v_bf, b1_col)

    # --- W1 InstanceNorm from the accumulated one-pass stats (true HW) --------
    if pad:
        ysum = ysum - pad * b1.reshape(1, out_ch, 1)        # padded cols are exactly b1
        ysq = ysq - pad * (b1 ** 2).reshape(1, out_ch, 1)
    mean_y = ysum / HW
    var_y = jnp.maximum(ysq / HW - mean_y ** 2, 0.0)
    out = (y_raw[:, :, :HW] - mean_y) * jax.lax.rsqrt(var_y + _EPS)

    # --- tiny language-side tail in plain JAX ----------------------------------
    pool = pool_sum[:, :, 0].reshape(B, NH, 1, n_l) / HW            # mean over true HW
    v2_h = value2.reshape(B, NH, Dv, n_l)
    l_new = (pool * v2_h).reshape(B, Vc, n_l)
    l_new_2 = jnp.einsum('oc,bcn->bon', w2, l_new, precision=_HIGH) + b2[None, :, None]
    emb_p = (jnp.einsum('oc,bc->bo', wpe, emb.astype(f32), precision=_HIGH)
             + bpe[None])[:, :, None]
    # NOTE: mean over full n_l (incl. masked tokens) matches torch AdaptiveAvgPool.
    l_new_g = jnp.mean(l_new, axis=-1, keepdims=True) * params['gamma'][0] + emb_p
    l_out = jnp.einsum('oc,bcn->bon', w3, l_new_g, precision=_HIGH) + b3[None, :, None] + emb_p
    return out, l_out, l_new_2


# ---------------------------------------------------------------------------
# Pure-JAX f32 reference (mirrors the PyTorch forward) for verification
# ---------------------------------------------------------------------------
def reference_forward(params, x, l, l_mask, emb, *,
                      key_channels, value_channels, num_heads):
    B, C, H, W = x.shape
    HW = H * W
    n_l = l.shape[-1]
    x2 = x.reshape(B, C, HW)
    lm = jnp.transpose(l_mask, (0, 2, 1))

    def c1(wn, bn, inp):
        return (jnp.einsum('oc,bcn->bon', params[wn][:, :, 0], inp,
                           precision=_HIGH) + params[bn][None, :, None])

    def inorm(y):
        mean = jnp.mean(y, axis=-1, keepdims=True)
        var = jnp.mean((y - mean) ** 2, axis=-1, keepdims=True)
        return (y - mean) / jnp.sqrt(var + _EPS)

    query = inorm(c1('f_query_w', 'f_query_b', x2))
    key = c1('f_key_w', 'f_key_b', l) * lm
    value = c1('f_value_w', 'f_value_b', l) * lm
    value2 = c1('f_value2_w', 'f_value2_b', l) * lm
    Dk = key_channels // num_heads
    Dv = value_channels // num_heads
    q = jnp.transpose(query, (0, 2, 1)).reshape(B, HW, num_heads, Dk).transpose(0, 2, 1, 3)
    k = key.reshape(B, num_heads, Dk, n_l)
    v = value.reshape(B, num_heads, Dv, n_l)
    v2 = value2.reshape(B, num_heads, Dv, n_l)
    sim = jnp.einsum('bhqd,bhdn->bhqn', q, k, precision=_HIGH) * key_channels ** (-0.5)
    sim = sim + (10000.0 * lm[:, None] - 10000.0)
    sim = jax.nn.softmax(sim, axis=-1)
    pool = jnp.mean(sim, axis=2, keepdims=True)
    l_new = (pool * v2).reshape(B, value_channels, n_l)
    l_new_2 = c1('W2_w', 'W2_b', l_new)
    out = jnp.einsum('bhqn,bhdn->bhqd', sim, v, precision=_HIGH)
    out = jnp.transpose(out, (0, 2, 1, 3)).reshape(B, HW, value_channels).transpose(0, 2, 1)
    out = inorm(c1('W1_w', 'W1_b', out))
    emb_p = c1('proj_emb_w', 'proj_emb_b', emb[:, :, None])
    l_new_g = jnp.mean(l_new, axis=-1, keepdims=True) * params['gamma'][0] + emb_p
    l_out = c1('W3_w', 'W3_b', l_new_g) + emb_p
    return out, l_out, l_new_2


# ---------------------------------------------------------------------------
# Deterministic parameter init (synthetic; shapes from the module __init__)
# ---------------------------------------------------------------------------
def init_params(key, v_in, l_in, key_ch, value_ch, out_ch):
    ks = jax.random.split(key, 16)

    def conv_w(k, cout, cin):
        return jax.random.normal(k, (cout, cin, 1), jnp.float32) * 0.05

    def conv_b(k, cout):
        return jax.random.normal(k, (cout,), jnp.float32) * 0.01

    return {
        'f_key_w': conv_w(ks[0], key_ch, l_in),      'f_key_b': conv_b(ks[1], key_ch),
        'f_query_w': conv_w(ks[2], key_ch, v_in),    'f_query_b': conv_b(ks[3], key_ch),
        'f_value_w': conv_w(ks[4], value_ch, l_in),  'f_value_b': conv_b(ks[5], value_ch),
        'f_value2_w': conv_w(ks[6], value_ch, l_in), 'f_value2_b': conv_b(ks[7], value_ch),
        'W1_w': conv_w(ks[8], out_ch, value_ch),     'W1_b': conv_b(ks[9], out_ch),
        'W2_w': conv_w(ks[10], value_ch, value_ch),  'W2_b': conv_b(ks[11], value_ch),
        'W3_w': conv_w(ks[12], value_ch, value_ch),  'W3_b': conv_b(ks[13], value_ch),
        'proj_emb_w': conv_w(ks[14], value_ch, l_in), 'proj_emb_b': conv_b(ks[15], value_ch),
        'gamma': jnp.zeros((1,), jnp.float32),       # torch init: gamma.data.fill_(0.0)
    }


def _check(params, x, l, l_mask, emb, *, key_ch, value_ch, num_heads, hw_tile):
    fwd = jax.jit(functools.partial(
        spatial_image_language_attention, key_channels=key_ch,
        value_channels=value_ch, num_heads=num_heads, hw_tile=hw_tile))
    got = jax.block_until_ready(fwd(params, x, l, l_mask, emb))
    want = reference_forward(params, x, l, l_mask, emb, key_channels=key_ch,
                             value_channels=value_ch, num_heads=num_heads)
    # `out` uses bf16 MXU operands and is InstanceNorm-normalized (unit scale);
    # the language-side paths are f32 end-to-end except the score matmul.
    names = ("out", "l_out", "l_new_2")
    tols = (8e-2, 2e-3, 3e-3)
    for name, g, w, tol in zip(names, got, want, tols):
        assert g.shape == w.shape, (name, g.shape, w.shape)
        err = float(jnp.max(jnp.abs(g - w)))
        assert jnp.allclose(g, w, atol=tol, rtol=tol), f"{name}: max abs err {err}"


if __name__ == "__main__":
    l_in, key_ch, value_ch, num_heads, n_l = 32, 32, 32, 2, 8
    out_ch = value_ch  # out_channels=None -> value_channels
    root = jax.random.PRNGKey(0)
    kp, kx1, kl1, ke1, kx2, kl2, ke2 = jax.random.split(root, 7)
    params = init_params(kp, 4, l_in, key_ch, value_ch, out_ch)

    # Config 1: HW = 256 -> two 128-wide tiles, no padding.
    B, v_in, H, W = 2, 4, 16, 16
    x = jax.random.normal(kx1, (B, v_in, H, W), jnp.float32)
    l = jax.random.normal(kl1, (B, l_in, n_l), jnp.float32)
    emb = jax.random.normal(ke1, (B, l_in), jnp.float32)
    valid = jnp.array([6, 8])
    l_mask = (jnp.arange(n_l)[None, :] < valid[:, None]).astype(jnp.float32)[:, :, None]
    _check(params, x, l, l_mask, emb, key_ch=key_ch, value_ch=value_ch,
           num_heads=num_heads, hw_tile=128)

    # Config 2: HW = 144 -> padded to 256, exercises the padded-column path.
    H2 = W2 = 12
    x2 = jax.random.normal(kx2, (B, v_in, H2, W2), jnp.float32)
    l2 = jax.random.normal(kl2, (B, l_in, n_l), jnp.float32)
    emb2 = jax.random.normal(ke2, (B, l_in), jnp.float32)
    valid2 = jnp.array([5, 8])
    l_mask2 = (jnp.arange(n_l)[None, :] < valid2[:, None]).astype(jnp.float32)[:, :, None]
    _check(params, x2, l2, l_mask2, emb2, key_ch=key_ch, value_ch=value_ch,
           num_heads=num_heads, hw_tile=128)

    print("KERNEL_OK")
</pallas_src>

<mosaic_0001>
module attributes {stable_mosaic.version = 11 : i64} {
  func.func @_attention_hw_tile_kernel(%arg0: i32, %arg1: i32, %arg2: memref<1x4x128xbf16, #tpu.memory_space<vmem>>, %arg3: memref<1x16x4xbf16, #tpu.memory_space<vmem>>, %arg4: memref<1x16x1xf32, #tpu.memory_space<vmem>>, %arg5: memref<1x32x16xbf16, #tpu.memory_space<vmem>>, %arg6: memref<32x1xf32, #tpu.memory_space<vmem>>, %arg7: memref<1x32x128xf32, #tpu.memory_space<vmem>>, %arg8: memref<1x16x1xf32, #tpu.memory_space<vmem>>, %arg9: memref<1x32x1xf32, #tpu.memory_space<vmem>>, %arg10: memref<1x32x1xf32, #tpu.memory_space<vmem>>) attributes {dimension_semantics = [#tpu.dimension_semantics<parallel>, #tpu.dimension_semantics<arbitrary>], iteration_bounds = array<i64: 2, 2>, scalar_prefetch = 0 : i64, scratch_operands = 0 : i64, tpu.core_type = #tpu.core_type<tc>, window_params = [{transform_indices = @transform_0, window_bounds = array<i64: 1, 4, 128>}, {transform_indices = @transform_1, window_bounds = array<i64: 1, 16, 4>}, {transform_indices = @transform_2, window_bounds = array<i64: 1, 16, 1>}, {transform_indices = @transform_3, window_bounds = array<i64: 1, 32, 16>}, {pipeline_mode = #tpu.pipeline_mode<synchronous>, transform_indices = @transform_4, window_bounds = array<i64: 32, 1>}, {transform_indices = @transform_5, window_bounds = array<i64: 1, 32, 128>}, {transform_indices = @transform_6, window_bounds = array<i64: 1, 16, 1>}, {transform_indices = @transform_7, window_bounds = array<i64: 1, 32, 1>}, {transform_indices = @transform_8, window_bounds = array<i64: 1, 32, 1>}]} {
    %c0_i32 = arith.constant 0 : i32
    %0 = arith.cmpi eq, %arg1, %c0_i32 : i32
    %1 = arith.extui %0 : i1 to i32
    %c0_i32_0 = arith.constant 0 : i32
    %2 = arith.cmpi ne, %1, %c0_i32_0 : i32
    scf.if %2 {
      %cst_41 = arith.constant 0.000000e+00 : f32
      %59 = vector.broadcast %cst_41 : f32 to vector<16x1xf32>
      %c0_42 = arith.constant 0 : index
      %c0_43 = arith.constant 0 : index
      %c0_44 = arith.constant 0 : index
      %60 = vector.load %arg8[%c0_42, %c0_43, %c0_44] : memref<1x16x1xf32, #tpu.memory_space<vmem>>, vector<1x16x1xf32>
      %61 = vector.shape_cast %60 : vector<1x16x1xf32> to vector<16x1xf32>
      %62 = vector.shape_cast %59 : vector<16x1xf32> to vector<1x16x1xf32>
      tpu.vector_store %arg8[%c0_42, %c0_43, %c0_44], %62 {strides = array<i32>} : memref<1x16x1xf32, #tpu.memory_space<vmem>>, vector<1x16x1xf32>,
      %cst_45 = arith.constant 0.000000e+00 : f32
      %63 = vector.broadcast %cst_45 : f32 to vector<32x1xf32>
      %c0_46 = arith.constant 0 : index
      %c0_47 = arith.constant 0 : index
      %c0_48 = arith.constant 0 : index
      %64 = vector.load %arg9[%c0_46, %c0_47, %c0_48] : memref<1x32x1xf32, #tpu.memory_space<vmem>>, vector<1x32x1xf32>
      %65 = vector.shape_cast %64 : vector<1x32x1xf32> to vector<32x1xf32>
      %66 = vector.shape_cast %63 : vector<32x1xf32> to vector<1x32x1xf32>
      tpu.vector_store %arg9[%c0_46, %c0_47, %c0_48], %66 {strides = array<i32>} : memref<1x32x1xf32, #tpu.memory_space<vmem>>, vector<1x32x1xf32>,
      %cst_49 = arith.constant 0.000000e+00 : f32
      %67 = vector.broadcast %cst_49 : f32 to vector<32x1xf32>
      %c0_50 = arith.constant 0 : index
      %c0_51 = arith.constant 0 : index
      %c0_52 = arith.constant 0 : index
      %68 = vector.load %arg10[%c0_50, %c0_51, %c0_52] : memref<1x32x1xf32, #tpu.memory_space<vmem>>, vector<1x32x1xf32>
      %69 = vector.shape_cast %68 : vector<1x32x1xf32> to vector<32x1xf32>
      %70 = vector.shape_cast %67 : vector<32x1xf32> to vector<1x32x1xf32>
      tpu.vector_store %arg10[%c0_50, %c0_51, %c0_52], %70 {strides = array<i32>} : memref<1x32x1xf32, #tpu.memory_space<vmem>>, vector<1x32x1xf32>,
    } else {
    }
    %c0 = arith.constant 0 : index
    %c0_1 = arith.constant 0 : index
    %c0_2 = arith.constant 0 : index
    %3 = vector.load %arg3[%c0, %c0_1, %c0_2] : memref<1x16x4xbf16, #tpu.memory_space<vmem>>, vector<1x16x4xbf16>
    %4 = vector.shape_cast %3 : vector<1x16x4xbf16> to vector<16x4xbf16>
    %c0_3 = arith.constant 0 : index
    %c0_4 = arith.constant 0 : index
    %c0_5 = arith.constant 0 : index
    %5 = vector.load %arg2[%c0_3, %c0_4, %c0_5] : memref<1x4x128xbf16, #tpu.memory_space<vmem>>, vector<1x4x128xbf16>
    %6 = vector.shape_cast %5 : vector<1x4x128xbf16> to vector<4x128xbf16>
    %cst = arith.constant dense<0.000000e+00> : vector<16x128xf32>
    %7 = tpu.matmul %4, %6, %cst {dimension_numbers = #tpu.dot_dimension_numbers<[1], [0], [0], [1], [0, 0, 1, 1], [], []>} : vector<16x4xbf16>, vector<4x128xbf16>, vector<16x128xf32> -> vector<16x128xf32>
    %c0_6 = arith.constant 0 : index
    %c0_7 = arith.constant 0 : index
    %c0_8 = arith.constant 0 : index
    %8 = vector.load %arg4[%c0_6, %c0_7, %c0_8] : memref<1x16x1xf32, #tpu.memory_space<vmem>>, vector<1x16x1xf32>
    %9 = vector.shape_cast %8 : vector<1x16x1xf32> to vector<16x1xf32>
    %10 = vector.broadcast %9 : vector<16x1xf32> to vector<16x128xf32>
    %11 = arith.addf %7, %10 : vector<16x128xf32>
    %12 = vector.shape_cast %11 : vector<16x128xf32> to vector<2x8x128xf32>
    %cst_9 = arith.constant dense<0xFF800000> : vector<2x128xf32>
    %13 = vector.multi_reduction <maximumf>, %12, %cst_9 [1] : vector<2x8x128xf32> to vector<2x128xf32>
    %14 = vector.shape_cast %13 : vector<2x128xf32> to vector<2x1x128xf32>
    %15 = vector.broadcast %14 : vector<2x1x128xf32> to vector<2x8x128xf32>
    %16 = arith.subf %12, %15 : vector<2x8x128xf32>
    %17 = math.exp %16 : vector<2x8x128xf32>
    %cst_10 = arith.constant dense<0.000000e+00> : vector<2x128xf32>
    %18 = vector.multi_reduction <add>, %17, %cst_10 [1] : vector<2x8x128xf32> to vector<2x128xf32>
    %19 = vector.shape_cast %18 : vector<2x128xf32> to vector<2x1x128xf32>
    %20 = tpu.reciprocal %19 : vector<2x1x128xf32> -> vector<2x1x128xf32>
    %21 = vector.broadcast %20 : vector<2x1x128xf32> to vector<2x8x128xf32>
    %22 = arith.mulf %17, %21 : vector<2x8x128xf32>
    %23 = vector.shape_cast %22 : vector<2x8x128xf32> to vector<16x128xf32>
    %c0_11 = arith.constant 0 : index
    %c0_12 = arith.constant 0 : index
    %c0_13 = arith.constant 0 : index
    %24 = vector.load %arg8[%c0_11, %c0_12, %c0_13] : memref<1x16x1xf32, #tpu.memory_space<vmem>>, vector<1x16x1xf32>
    %25 = vector.shape_cast %24 : vector<1x16x1xf32> to vector<16x1xf32>
    %cst_14 = arith.constant dense<0.000000e+00> : vector<16xf32>
    %26 = vector.multi_reduction <add>, %23, %cst_14 [1] : vector<16x128xf32> to vector<16xf32>
    %27 = vector.shape_cast %26 : vector<16xf32> to vector<16x1xf32>
    %28 = arith.addf %25, %27 : vector<16x1xf32>
    %c0_15 = arith.constant 0 : index
    %c0_16 = arith.constant 0 : index
    %c0_17 = arith.constant 0 : index
    %29 = vector.load %arg8[%c0_15, %c0_16, %c0_17] : memref<1x16x1xf32, #tpu.memory_space<vmem>>, vector<1x16x1xf32>
    %30 = vector.shape_cast %29 : vector<1x16x1xf32> to vector<16x1xf32>
    %31 = vector.shape_cast %28 : vector<16x1xf32> to vector<1x16x1xf32>
    tpu.vector_store %arg8[%c0_15, %c0_16, %c0_17], %31 {strides = array<i32>} : memref<1x16x1xf32, #tpu.memory_space<vmem>>, vector<1x16x1xf32>,
    %c0_18 = arith.constant 0 : index
    %c0_19 = arith.constant 0 : index
    %c0_20 = arith.constant 0 : index
    %32 = vector.load %arg5[%c0_18, %c0_19, %c0_20] : memref<1x32x16xbf16, #tpu.memory_space<vmem>>, vector<1x32x16xbf16>
    %33 = vector.shape_cast %32 : vector<1x32x16xbf16> to vector<32x16xbf16>
    %34 = arith.truncf %23 : vector<16x128xf32> to vector<16x128xbf16>
    %cst_21 = arith.constant dense<0.000000e+00> : vector<32x128xf32>
    %35 = tpu.matmul %33, %34, %cst_21 {dimension_numbers = #tpu.dot_dimension_numbers<[1], [0], [0], [1], [0, 0, 1, 1], [], []>} : vector<32x16xbf16>, vector<16x128xbf16>, vector<32x128xf32> -> vector<32x128xf32>
    %c0_22 = arith.constant 0 : index
    %c0_23 = arith.constant 0 : index
    %36 = vector.load %arg6[%c0_22, %c0_23] : memref<32x1xf32, #tpu.memory_space<vmem>>, vector<32x1xf32>
    %37 = vector.broadcast %36 : vector<32x1xf32> to vector<32x128xf32>
    %38 = arith.addf %35, %37 : vector<32x128xf32>
    %c0_24 = arith.constant 0 : index
    %c0_25 = arith.constant 0 : index
    %c0_26 = arith.constant 0 : index
    %39 = vector.load %arg7[%c0_24, %c0_25, %c0_26] : memref<1x32x128xf32, #tpu.memory_space<vmem>>, vector<1x32x128xf32>
    %40 = vector.shape_cast %39 : vector<1x32x128xf32> to vector<32x128xf32>
    %41 = vector.shape_cast %38 : vector<32x128xf32> to vector<1x32x128xf32>
    tpu.vector_store %arg7[%c0_24, %c0_25, %c0_26], %41 {strides = array<i32>} : memref<1x32x128xf32, #tpu.memory_space<vmem>>, vector<1x32x128xf32>,
    %c0_27 = arith.constant 0 : index
    %c0_28 = arith.constant 0 : index
    %c0_29 = arith.constant 0 : index
    %42 = vector.load %arg9[%c0_27, %c0_28, %c0_29] : memref<1x32x1xf32, #tpu.memory_space<vmem>>, vector<1x32x1xf32>
    %43 = vector.shape_cast %42 : vector<1x32x1xf32> to vector<32x1xf32>
    %cst_30 = arith.constant dense<0.000000e+00> : vector<32xf32>
    %44 = vector.multi_reduction <add>, %38, %cst_30 [1] : vector<32x128xf32> to vector<32xf32>
    %45 = vector.shape_cast %44 : vector<32xf32> to vector<32x1xf32>
    %46 = arith.addf %43, %45 : vector<32x1xf32>
    %c0_31 = arith.constant 0 : index
    %c0_32 = arith.constant 0 : index
    %c0_33 = arith.constant 0 : index
    %47 = vector.load %arg9[%c0_31, %c0_32, %c0_33] : memref<1x32x1xf32, #tpu.memory_space<vmem>>, vector<1x32x1xf32>
    %48 = vector.shape_cast %47 : vector<1x32x1xf32> to vector<32x1xf32>
    %49 = vector.shape_cast %46 : vector<32x1xf32> to vector<1x32x1xf32>
    tpu.vector_store %arg9[%c0_31, %c0_32, %c0_33], %49 {strides = array<i32>} : memref<1x32x1xf32, #tpu.memory_space<vmem>>, vector<1x32x1xf32>,
    %c0_34 = arith.constant 0 : index
    %c0_35 = arith.constant 0 : index
    %c0_36 = arith.constant 0 : index
    %50 = vector.load %arg10[%c0_34, %c0_35, %c0_36] : memref<1x32x1xf32, #tpu.memory_space<vmem>>, vector<1x32x1xf32>
    %51 = vector.shape_cast %50 : vector<1x32x1xf32> to vector<32x1xf32>
    %52 = arith.mulf %38, %38 : vector<32x128xf32>
    %cst_37 = arith.constant dense<0.000000e+00> : vector<32xf32>
    %53 = vector.multi_reduction <add>, %52, %cst_37 [1] : vector<32x128xf32> to vector<32xf32>
    %54 = vector.shape_cast %53 : vector<32xf32> to vector<32x1xf32>
    %55 = arith.addf %51, %54 : vector<32x1xf32>
    %c0_38 = arith.constant 0 : index
    %c0_39 = arith.constant 0 : index
    %c0_40 = arith.constant 0 : index
    %56 = vector.load %arg10[%c0_38, %c0_39, %c0_40] : memref<1x32x1xf32, #tpu.memory_space<vmem>>, vector<1x32x1xf32>
    %57 = vector.shape_cast %56 : vector<1x32x1xf32> to vector<32x1xf32>
    %58 = vector.shape_cast %55 : vector<32x1xf32> to vector<1x32x1xf32>
    tpu.vector_store %arg10[%c0_38, %c0_39, %c0_40], %58 {strides = array<i32>} : memref<1x32x1xf32, #tpu.memory_space<vmem>>, vector<1x32x1xf32>,
    return
  }
  func.func @transform_0(%arg0: i32, %arg1: i32) -> (i32, i32, i32) {
    %c0_i32 = arith.constant 0 : i32
    %c0_i32_0 = arith.constant 0 : i32
    return %arg0, %c0_i32, %arg1 : i32, i32, i32
  }
  func.func @transform_1(%arg0: i32, %arg1: i32) -> (i32, i32, i32) {
    %c0_i32 = arith.constant 0 : i32
    %c0_i32_0 = arith.constant 0 : i32
    %c0_i32_1 = arith.constant 0 : i32
    return %arg0, %c0_i32, %c0_i32_0 : i32, i32, i32
  }
  func.func @transform_2(%arg0: i32, %arg1: i32) -> (i32, i32, i32) {
    %c0_i32 = arith.constant 0 : i32
    %c0_i32_0 = arith.constant 0 : i32
    %c0_i32_1 = arith.constant 0 : i32
    return %arg0, %c0_i32, %c0_i32_0 : i32, i32, i32
  }
  func.func @transform_3(%arg0: i32, %arg1: i32) -> (i32, i32, i32) {
    %c0_i32 = arith.constant 0 : i32
    %c0_i32_0 = arith.constant 0 : i32
    %c0_i32_1 = arith.constant 0 : i32
    return %arg0, %c0_i32, %c0_i32_0 : i32, i32, i32
  }
  func.func @transform_4(%arg0: i32, %arg1: i32) -> (i32, i32) {
    %c0_i32 = arith.constant 0 : i32
    %c0_i32_0 = arith.constant 0 : i32
    %c0_i32_1 = arith.constant 0 : i32
    return %c0_i32, %c0_i32_0 : i32, i32
  }
  func.func @transform_5(%arg0: i32, %arg1: i32) -> (i32, i32, i32) {
    %c0_i32 = arith.constant 0 : i32
    %c0_i32_0 = arith.constant 0 : i32
    return %arg0, %c0_i32, %arg1 : i32, i32, i32
  }
  func.func @transform_6(%arg0: i32, %arg1: i32) -> (i32, i32, i32) {
    %c0_i32 = arith.constant 0 : i32
    %c0_i32_0 = arith.constant 0 : i32
    %c0_i32_1 = arith.constant 0 : i32
    return %arg0, %c0_i32, %c0_i32_0 : i32, i32, i32
  }
  func.func @transform_7(%arg0: i32, %arg1: i32) -> (i32, i32, i32) {
    %c0_i32 = arith.constant 0 : i32
    %c0_i32_0 = arith.constant 0 : i32
    %c0_i32_1 = arith.constant 0 : i32
    return %arg0, %c0_i32, %c0_i32_0 : i32, i32, i32
  }
  func.func @transform_8(%arg0: i32, %arg1: i32) -> (i32, i32, i32) {
    %c0_i32 = arith.constant 0 : i32
    %c0_i32_0 = arith.constant 0 : i32
    %c0_i32_1 = arith.constant 0 : i32
    return %arg0, %c0_i32, %c0_i32_0 : i32, i32, i32
  }
}

</mosaic_0001>

<llo_original>
// kernel: squeeze.18
$region0: #{squeeze.18}
  %s0 = inlined_call_operand.vmem [shape: f32[32,4], index: 0, kind: input, shape index: {}]
  %s1 = inlined_call_operand.vmem [shape: f32[2,16,4], index: 1, kind: output, shape index: {}]
  $region1: #{squeeze.18} parent=0
    #allocation0 [shape = 'u8[16384]{0}', space=vmem, size = 0x4000, scoped, tag = 'scoped mem for output reshape']
    #allocation1 [shape = 'u8[4096]{0}', space=vmem, size = 0x1000, scoped, tag = 'scoped mem for input reshape']
    %s3 = sshllo.u32 0, 4
    %v4 = vld [vmem:[%s0] sm:%s3]
    %5 = vst [vmem:[#allocation1] sm:%s3] %v4
    %v6 = vld [vmem:[#allocation1] sm:$0xf]
    %vm7 = vcmask 130048
    %8 = vst.msk [vmem:[#allocation0] ss:$8 sm:$0xf] %vm7, %v6
    %v9 = vld [vmem:[#allocation1] sm:$0xf]
    %10 = vrot.lane.b32.xlu0 %v9, 112
    %v11 = vpop.permute.xlu0 %10
    %vm12 = vcmask 130048
    %s13 = scalar_lea.vmem [#allocation0], 1
    %14 = vst.msk [vmem:[%s13] ss:$8 sm:$0xf] %vm12, %v11
    %s16 = sshllo.u32 0, 2
    %v18 = vld [vmem:[#allocation0] sm:%s16]
    %s19 = sshllo.u32 0, 2
    %20 = vst [vmem:[%s1] sm:%s19] %v18
    %s21 = scalar_lea.vmem [#allocation0], 8
    %v22 = vld [vmem:[%s21] sm:%s16]
    %s23 = sshllo.u32 0, 2
    %s24 = scalar_lea.vmem %s1, 2
    %25 = vst [vmem:[%s24] sm:%s23] %v22
    %s26 = scalar_lea.vmem [#allocation0], 16
    %v27 = vld [vmem:[%s26] sm:%s16]
    %s28 = sshllo.u32 0, 2
    %s29 = smul.addr 2, 2
    %s30 = scalar_lea.vmem %s1, %s29
    %31 = vst [vmem:[%s30] sm:%s28] %v27
    %s32 = scalar_lea.vmem [#allocation0], 24
    %v33 = vld [vmem:[%s32] sm:%s16]
    %s34 = sshllo.u32 0, 2
    %s35 = smul.addr 2, 3
    %s36 = scalar_lea.vmem %s1, %s35
    %37 = vst [vmem:[%s36] sm:%s34] %v33

// kernel: spatial_image_language_attention.1
$region0: #{spatial_image_language_attention.1}
  #allocation0 [shape = 'u32[]', space=smem, size = 0x4, offset = 0x4, fixed_abs, tag = 'smem constant byte address 0x4 - core index']
  #allocation1 [shape = 'u32[144,128]{1,0:T(1,128)}', space=vmem, size = 0x12000, scoped, tag = 'internal scratch']
  %s0 = inlined_call_operand.vmem [shape: bf16[2,4,256], index: 0, kind: input, shape index: {}]
  %s1 = inlined_call_operand.vmem [shape: bf16[2,16,4], index: 1, kind: input, shape index: {}]
  %s2 = inlined_call_operand.vmem [shape: f32[2,16,1], index: 2, kind: input, shape index: {}]
  %s3 = inlined_call_operand.vmem [shape: bf16[2,32,16], index: 3, kind: input, shape index: {}]
  %s4 = inlined_call_operand.vmem [shape: f32[32,1], index: 4, kind: input, shape index: {}]
  %s5 = inlined_call_operand.vmem [shape: f32[2,32,256], index: 5, kind: output, shape index: {0}]
  %s6 = inlined_call_operand.vmem [shape: f32[2,16,1], index: 6, kind: output, shape index: {1}]
  %s7 = inlined_call_operand.vmem [shape: f32[2,32,1], index: 7, kind: output, shape index: {2}]
  %s8 = inlined_call_operand.vmem [shape: f32[2,32,1], index: 8, kind: output, shape index: {3}]
  %9 = xla_tuple %s5, %s6, %s7, %s8
  %s10 = sld [smem:[#allocation0]]
  $region115: #{spatial_image_language_attention.1} parent=0
    _
  %s12 = ssub.s32 1, %s10
  %s13 = scalar_select 0, %s12, %s10
  $region1: #{spatial_image_language_attention.1} parent=0
    #allocation2 [shape = 'u8[32768]{0}', space=vmem, size = 0x8000, scoped, tag = 'output window, operand 0']
    loop: start=0, step=1, limit=6
    $region2: #{spatial_image_language_attention.1} parent=1 // loop_pre_header
      _
    $region3: #{spatial_image_language_attention.1} parent=1 // loop_header
      %s15 = sphi 0, %s19
      %p16 = scmp.ge.s32.totalorder %s15, 6
      %s22 = sphi 0, %s34
      %s23 = sphi 0, %s30
      %s24 = sphi 0, %s22
      %s25 = sphi 0, %s23
      %s26 = sphi 0, %s24
      %s27 = sphi 0, %s25
      %s39 = sphi 0, %s41
      %s42 = sphi 0, %s39
      %s43 = sphi 0, %s42
      %s59 = sphi 0, %s43
      %s65 = sphi 0, %s67
      %s68 = sphi 0, %s65
      %s69 = sphi 0, %s68
      %s85 = sphi 0, %s69
      %s91 = sphi 0, %s93
      %s94 = sphi 0, %s91
      %s95 = sphi 0, %s94
      %s111 = sphi 0, %s95
      %s117 = sphi 0, %s119
      %s120 = sphi 0, %s117
      %s121 = sphi 0, %s120
      %s137 = sphi 0, %s121
      %s141 = sphi 0, %s141
      %s143 = sphi 0, %s141
      %s144 = sphi 0, %s143
      %s158 = sphi 0, %s144
      %s166 = sphi 0, %s168
      %s169 = sphi 0, %s166
      %s170 = sphi 0, %s169
      %s186 = sphi 0, %s170
      %s192 = sphi 0, %s194
      %s195 = sphi 0, %s192
      %s196 = sphi 0, %s195
      %s212 = sphi 0, %s196
      %s218 = sphi 0, %s220
      %s221 = sphi 0, %s218
      %s222 = sphi 0, %s221
      %s238 = sphi 0, %s222
      %s244 = sphi 0, %s246
      %s247 = sphi 0, %s244
      %s248 = sphi 0, %s247
      %s264 = sphi 0, %s248
    $region4: #{spatial_image_language_attention.1} parent=1 // loop_header_branch
      %18 = sbr.rel (%p16) target = $region8
    $region5: #{spatial_image_language_attention.1} parent=1 // loop_body
      %s20 = ssub.s32 %s15, 1
      %s21 = ssub.s32 %s15, 2
      %s28 = sadd.s32 1, %s23
      %p29 = scmp.ge.s32.totalorder %s28, 2
      %s30 = scalar_select %p29, 0, %s28
      %s31 = sadd.s32 1, %s22
      %s32 = scalar_select %p29, %s31, %s22
      %p33 = scmp.ge.s32.totalorder %s32, 2
      %s34 = scalar_select %p33, 0, %s32
      %s35 = ssub.s32 %s22, %s34
      %s36 = ssub.s32 %s23, %s30
      %s37 = sor.u32 %s35, %s36
      %p38 = scmp.eq.s32.totalorder %s37, 0
      %s40 = sadd.s32 %s39, 1
      %s41 = scalar_select %p38, %s39, %s40
      %p44 = pneg %p38
      %p45 = scmp.eq.s32.totalorder %s15, 3
      %p46 = por %p44, %p45
      %p47 = scmp.ne.s32.totalorder %s39, %s42
      %p48 = scmp.eq.s32.totalorder %s15, 0
      %p49 = por %p47, %p48
      %p50 = scmp.ne.s32.totalorder %s39, %s42
      %p51 = scmp.eq.s32.totalorder %s20, 3
      %p52 = por %p50, %p51
      %p53 = scmp.ne.s32.totalorder %s42, %s43
      %p54 = scmp.eq.s32.totalorder %s20, 0
      %p55 = por %p53, %p54
      %p56 = scmp.ne.s32.totalorder %s42, %s43
      %p57 = scmp.eq.s32.totalorder %s21, 3
      %p58 = por %p56, %p57
      %p60 = scmp.ne.s32.totalorder %s43, %s59
      %p61 = scmp.eq.s32.totalorder %s21, 0
      %p62 = por %p60, %p61
      %s63 = ssub.s32 %s22, %s34
      %p64 = scmp.eq.s32.totalorder %s63, 0
      %s66 = sadd.s32 %s65, 1
      %s67 = scalar_select %p64, %s65, %s66
      %p70 = pneg %p64
      %p71 = scmp.eq.s32.totalorder %s15, 3
      %p72 = por %p70, %p71
      %p73 = scmp.ne.s32.totalorder %s65, %s68
      %p74 = scmp.eq.s32.totalorder %s15, 0
      %p75 = por %p73, %p74
      %p76 = scmp.ne.s32.totalorder %s65, %s68
      %p77 = scmp.eq.s32.totalorder %s20, 3
      %p78 = por %p76, %p77
      %p79 = scmp.ne.s32.totalorder %s68, %s69
      %p80 = scmp.eq.s32.totalorder %s20, 0
      %p81 = por %p79, %p80
      %p82 = scmp.ne.s32.totalorder %s68, %s69
      %p83 = scmp.eq.s32.totalorder %s21, 3
      %p84 = por %p82, %p83
      %p86 = scmp.ne.s32.totalorder %s69, %s85
      %p87 = scmp.eq.s32.totalorder %s21, 0
      %p88 = por %p86, %p87
      %s89 = ssub.s32 %s22, %s34
      %p90 = scmp.eq.s32.totalorder %s89, 0
      %s92 = sadd.s32 %s91, 1
      %s93 = scalar_select %p90, %s91, %s92
      %p96 = pneg %p90
      %p97 = scmp.eq.s32.totalorder %s15, 3
      %p98 = por %p96, %p97
      %p99 = scmp.ne.s32.totalorder %s91, %s94
      %p100 = scmp.eq.s32.totalorder %s15, 0
      %p101 = por %p99, %p100
      %p102 = scmp.ne.s32.totalorder %s91, %s94
      %p103 = scmp.eq.s32.totalorder %s20, 3
      %p104 = por %p102, %p103
      %p105 = scmp.ne.s32.totalorder %s94, %s95
      %p106 = scmp.eq.s32.totalorder %s20, 0
      %p107 = por %p105, %p106
      %p108 = scmp.ne.s32.totalorder %s94, %s95
      %p109 = scmp.eq.s32.totalorder %s21, 3
      %p110 = por %p108, %p109
      %p112 = scmp.ne.s32.totalorder %s95, %s111
      %p113 = scmp.eq.s32.totalorder %s21, 0
      %p114 = por %p112, %p113
      %s115 = ssub.s32 %s22, %s34
      %p116 = scmp.eq.s32.totalorder %s115, 0
      %s118 = sadd.s32 %s117, 1
      %s119 = scalar_select %p116, %s117, %s118
      %p122 = pneg %p116
      %p123 = scmp.eq.s32.totalorder %s15, 3
      %p124 = por %p122, %p123
      %p125 = scmp.ne.s32.totalorder %s117, %s120
      %p126 = scmp.eq.s32.totalorder %s15, 0
      %p127 = por %p125, %p126
      %p128 = scmp.ne.s32.totalorder %s117, %s120
      %p129 = scmp.eq.s32.totalorder %s20, 3
      %p130 = por %p128, %p129
      %p131 = scmp.ne.s32.totalorder %s120, %s121
      %p132 = scmp.eq.s32.totalorder %s20, 0
      %p133 = por %p131, %p132
      %p134 = scmp.ne.s32.totalorder %s120, %s121
      %p135 = scmp.eq.s32.totalorder %s21, 3
      %p136 = por %p134, %p135
      %p138 = scmp.ne.s32.totalorder %s121, %s137
      %p139 = scmp.eq.s32.totalorder %s21, 0
      %p140 = por %p138, %p139
      %s142 = sadd.s32 %s141, 1
      %p145 = scmp.eq.s32.totalorder %s15, 3
      %p146 = scmp.ne.s32.totalorder %s141, %s143
      %p147 = scmp.eq.s32.totalorder %s15, 0
      %p148 = por %p146, %p147
      %p149 = scmp.ne.s32.totalorder %s141, %s143
      %p150 = scmp.eq.s32.totalorder %s20, 3
      %p151 = por %p149, %p150
      %p152 = scmp.ne.s32.totalorder %s143, %s144
      %p153 = scmp.eq.s32.totalorder %s20, 0
      %p154 = por %p152, %p153
      %p155 = scmp.ne.s32.totalorder %s143, %s144
      %p156 = scmp.eq.s32.totalorder %s21, 3
      %p157 = por %p155, %p156
      %p159 = scmp.ne.s32.totalorder %s144, %s158
      %p160 = scmp.eq.s32.totalorder %s21, 0
      %p161 = por %p159, %p160
      %s162 = ssub.s32 %s22, %s34
      %s163 = ssub.s32 %s23, %s30
      %s164 = sor.u32 %s162, %s163
      %p165 = scmp.eq.s32.totalorder %s164, 0
      %s167 = sadd.s32 %s166, 1
      %s168 = scalar_select %p165, %s166, %s167
      %p171 = pneg %p165
      %p172 = scmp.eq.s32.totalorder %s15, 3
      %p173 = por %p171, %p172
      %p174 = scmp.ne.s32.totalorder %s166, %s169
      %p175 = scmp.eq.s32.totalorder %s15, 0
      %p176 = por %p174, %p175
      %p177 = scmp.ne.s32.totalorder %s166, %s169
      %p178 = scmp.eq.s32.totalorder %s20, 3
      %p179 = por %p177, %p178
      %p180 = scmp.ne.s32.totalorder %s169, %s170
      %p181 = scmp.eq.s32.totalorder %s20, 0
      %p182 = por %p180, %p181
      %p183 = scmp.ne.s32.totalorder %s169, %s170
      %p184 = scmp.eq.s32.totalorder %s21, 3
      %p185 = por %p183, %p184
      %p187 = scmp.ne.s32.totalorder %s170, %s186
      %p188 = scmp.eq.s32.totalorder %s21, 0
      %p189 = por %p187, %p188
      %s190 = ssub.s32 %s22, %s34
      %p191 = scmp.eq.s32.totalorder %s190, 0
      %s193 = sadd.s32 %s192, 1
      %s194 = scalar_select %p191, %s192, %s193
      %p197 = pneg %p191
      %p198 = scmp.eq.s32.totalorder %s15, 3
      %p199 = por %p197, %p198
      %p200 = scmp.ne.s32.totalorder %s192, %s195
      %p201 = scmp.eq.s32.totalorder %s15, 0
      %p202 = por %p200, %p201
      %p203 = scmp.ne.s32.totalorder %s192, %s195
      %p204 = scmp.eq.s32.totalorder %s20, 3
      %p205 = por %p203, %p204
      %p206 = scmp.ne.s32.totalorder %s195, %s196
      %p207 = scmp.eq.s32.totalorder %s20, 0
      %p208 = por %p206, %p207
      %p209 = scmp.ne.s32.totalorder %s195, %s196
      %p210 = scmp.eq.s32.totalorder %s21, 3
      %p211 = por %p209, %p210
      %p213 = scmp.ne.s32.totalorder %s196, %s212
      %p214 = scmp.eq.s32.totalorder %s21, 0
      %p215 = por %p213, %p214
      %s216 = ssub.s32 %s22, %s34
      %p217 = scmp.eq.s32.totalorder %s216, 0
      %s219 = sadd.s32 %s218, 1
      %s220 = scalar_select %p217, %s218, %s219
      %p223 = pneg %p217
      %p224 = scmp.eq.s32.totalorder %s15, 3
      %p225 = por %p223, %p224
      %p226 = scmp.ne.s32.totalorder %s218, %s221
      %p227 = scmp.eq.s32.totalorder %s15, 0
      %p228 = por %p226, %p227
      %p229 = scmp.ne.s32.totalorder %s218, %s221
      %p230 = scmp.eq.s32.totalorder %s20, 3
      %p231 = por %p229, %p230
      %p232 = scmp.ne.s32.totalorder %s221, %s222
      %p233 = scmp.eq.s32.totalorder %s20, 0
      %p234 = por %p232, %p233
      %p235 = scmp.ne.s32.totalorder %s221, %s222
      %p236 = scmp.eq.s32.totalorder %s21, 3
      %p237 = por %p235, %p236
      %p239 = scmp.ne.s32.totalorder %s222, %s238
      %p240 = scmp.eq.s32.totalorder %s21, 0
      %p241 = por %p239, %p240
      %s242 = ssub.s32 %s22, %s34
      %p243 = scmp.eq.s32.totalorder %s242, 0
      %s245 = sadd.s32 %s244, 1
      %s246 = scalar_select %p243, %s244, %s245
      %p249 = pneg %p243
      %p250 = scmp.eq.s32.totalorder %s15, 3
      %p251 = por %p249, %p250
      %p252 = scmp.ne.s32.totalorder %s244, %s247
      %p253 = scmp.eq.s32.totalorder %s15, 0
      %p254 = por %p252, %p253
      %p255 = scmp.ne.s32.totalorder %s244, %s247
      %p256 = scmp.eq.s32.totalorder %s20, 3
      %p257 = por %p255, %p256
      %p258 = scmp.ne.s32.totalorder %s247, %s248
      %p259 = scmp.eq.s32.totalorder %s20, 0
      %p260 = por %p258, %p259
      %p261 = scmp.ne.s32.totalorder %s247, %s248
      %p262 = scmp.eq.s32.totalorder %s21, 3
      %p263 = por %p261, %p262
      %p265 = scmp.ne.s32.totalorder %s248, %s264
      %p266 = scmp.eq.s32.totalorder %s21, 0
      %p267 = por %p265, %p266
      %p268 = scmp.le.s32.totalorder 1, %s15
      %p269 = scmp.lt.s32.totalorder %s15, 5
      %p270 = pnand %p268, %p269
      %p271 = pneg %p270
      // Predicated region
      $region9: #{spatial_image_language_attention.1} parent=5 // pred_check
        _
      $region10: #{spatial_image_language_attention.1} parent=5 // pred_check_branch
        %273 = sbr.rel (%p270) target = $region12
      $region11: #{spatial_image_language_attention.1} parent=5 // pred_region
        %s274 = ssub.s32 %s15, 1
        // Predicated region
        $region13: #{spatial_image_language_attention.1} parent=11 // pred_check
          %p275 = pneg %p154
        $region14: #{spatial_image_language_attention.1} parent=11 // pred_check_branch
          %277 = sbr.rel (%p275) target = $region16
        $region15: #{spatial_image_language_attention.1} parent=11 // pred_region
          _
        $region16: #{spatial_image_language_attention.1} parent=11 // pred_fallthru
          _
      $region12: #{spatial_image_language_attention.1} parent=5 // pred_fallthru
        _
      %p278 = scmp.lt.s32.totalorder %s15, 4
      // Predicated region
      $region17: #{spatial_image_language_attention.1} parent=5 // pred_check
        %p279 = pneg %p278
      $region18: #{spatial_image_language_attention.1} parent=5 // pred_check_branch
        %281 = sbr.rel (%p279) target = $region20
      $region19: #{spatial_image_language_attention.1} parent=5 // pred_region
        // Predicated region
        $region21: #{spatial_image_language_attention.1} parent=19 // pred_check
          %p282 = pneg %p49
        $region22: #{spatial_image_language_attention.1} parent=19 // pred_check_branch
          %284 = sbr.rel (%p282) target = $region24
        $region23: #{spatial_image_language_attention.1} parent=19 // pred_region
          %p285 = scmp.lt.s32.totalorder %s22, 1
          %s286 = scalar_select %p285, %s22, 1
          %p287 = scmp.lt.s32.totalorder %s23, 1
          %s288 = scalar_select %p287, %s23, 1
          %s289 = smul.addr %s286, 2
          %s290 = sadd.s32 %s288, %s289
          %s291 = smul.addr %s290, 2
          %s292 = scalar_lea.vmem %s0, %s291
        $region24: #{spatial_image_language_attention.1} parent=19 // pred_fallthru
          _
        // Predicated region
        $region25: #{spatial_image_language_attention.1} parent=19 // pred_check
          %p293 = pneg %p75
        $region26: #{spatial_image_language_attention.1} parent=19 // pred_check_branch
          %295 = sbr.rel (%p293) target = $region28
        $region27: #{spatial_image_language_attention.1} parent=19 // pred_region
          %p296 = scmp.lt.s32.totalorder %s22, 1
          %s297 = scalar_select %p296, %s22, 1
          %s298 = smul.addr %s297, 2
          %s299 = smul.addr %s298, 4
          %s300 = scalar_lea.vmem %s1, %s299
        $region28: #{spatial_image_language_attention.1} parent=19 // pred_fallthru
          _
        // Predicated region
        $region29: #{spatial_image_language_attention.1} parent=19 // pred_check
          %p301 = pneg %p101
        $region30: #{spatial_image_language_attention.1} parent=19 // pred_check_branch
          %303 = sbr.rel (%p301) target = $region32
        $region31: #{spatial_image_language_attention.1} parent=19 // pred_region
          %p304 = scmp.lt.s32.totalorder %s22, 1
          %s305 = scalar_select %p304, %s22, 1
          %s306 = smul.addr %s305, 2
          %s307 = smul.addr %s306, 8
          %s308 = scalar_lea.vmem %s2, %s307
        $region32: #{spatial_image_language_attention.1} parent=19 // pred_fallthru
          _
        // Predicated region
        $region33: #{spatial_image_language_attention.1} parent=19 // pred_check
          %p309 = pneg %p127
        $region34: #{spatial_image_language_attention.1} parent=19 // pred_check_branch
          %311 = sbr.rel (%p309) target = $region36
        $region35: #{spatial_image_language_attention.1} parent=19 // pred_region
          %p312 = scmp.lt.s32.totalorder %s22, 1
          %s313 = scalar_select %p312, %s22, 1
          %s314 = smul.addr %s313, 4
          %s315 = smul.addr %s314, 4
          %s316 = scalar_lea.vmem %s3, %s315
        $region36: #{spatial_image_language_attention.1} parent=19 // pred_fallthru
          _
      $region20: #{spatial_image_language_attention.1} parent=5 // pred_fallthru
        _
      %p317 = scmp.le.s32.totalorder 1, %s15
      %p318 = scmp.lt.s32.totalorder %s15, 5
      %p319 = pnand %p317, %p318
      %p320 = pneg %p319
      // Predicated region
      $region37: #{spatial_image_language_attention.1} parent=5 // pred_check
        _
      $region38: #{spatial_image_language_attention.1} parent=5 // pred_check_branch
        %322 = sbr.rel (%p319) target = $region40
      $region39: #{spatial_image_language_attention.1} parent=5 // pred_region
        %s323 = ssub.s32 %s15, 1
        %p324 = scmp.lt.s32.totalorder %s24, 1
        %s325 = scalar_select %p324, %s24, 1
        %p326 = scmp.lt.s32.totalorder %s25, 1
        %s327 = scalar_select %p326, %s25, 1
        %s328 = smul.addr %s325, 2
        %s329 = sadd.s32 %s327, %s328
        %s330 = smul.addr %s329, 2
        %s331 = scalar_lea.vmem %s0, %s330
        %p332 = pneg %p55
        %p333 = pneg %p52
        %p334 = scmp.lt.s32.totalorder %s24, 1
        %s335 = scalar_select %p334, %s24, 1
        %s336 = smul.addr %s335, 2
        %s337 = smul.addr %s336, 4
        %s338 = scalar_lea.vmem %s1, %s337
        %p339 = pneg %p81
        %p340 = pneg %p78
        %p341 = scmp.lt.s32.totalorder %s24, 1
        %s342 = scalar_select %p341, %s24, 1
        %s343 = smul.addr %s342, 2
        %s344 = smul.addr %s343, 8
        %s345 = scalar_lea.vmem %s2, %s344
        %p346 = pneg %p107
        %p347 = pneg %p104
        %p348 = scmp.lt.s32.totalorder %s24, 1
        %s349 = scalar_select %p348, %s24, 1
        %s350 = smul.addr %s349, 4
        %s351 = smul.addr %s350, 4
        %s352 = scalar_lea.vmem %s3, %s351
        %p353 = pneg %p133
        %p354 = pneg %p130
        %p355 = pneg %p154
        %p356 = pneg %p151
        %p357 = pneg %p182
        %p358 = pneg %p179
        %s359 = sand.u32 %s169, 1
        %s360 = sand.u32 %s169, 1
        %s361 = smul.addr %s360, 32
        %s362 = scalar_lea.vmem [#allocation2], %s361
        %p363 = pneg %p208
        %p364 = pneg %p205
        %p365 = scmp.lt.s32.totalorder %s24, 1
        %s366 = scalar_select %p365, %s24, 1
        %s367 = smul.addr %s366, 2
        %s368 = smul.addr %s367, 8
        %s369 = scalar_lea.vmem %s6, %s368
        %p370 = pneg %p234
        %p371 = pneg %p231
        %p372 = scmp.lt.s32.totalorder %s24, 1
        %s373 = scalar_select %p372, %s24, 1
        %s374 = smul.addr %s373, 4
        %s375 = smul.addr %s374, 8
        %s376 = scalar_lea.vmem %s7, %s375
        %p377 = pneg %p260
        %p378 = pneg %p257
        %p379 = scmp.lt.s32.totalorder %s24, 1
        %s380 = scalar_select %p379, %s24, 1
        %s381 = smul.addr %s380, 4
        %s382 = smul.addr %s381, 8
        %s383 = scalar_lea.vmem %s8, %s382
        %p384 = scmp.lt.s32.totalorder %s24, 1
        %s385 = scalar_select %p384, %s24, 1
        %p386 = scmp.lt.s32.totalorder %s25, 1
        %s387 = scalar_select %p386, %s25, 1
        %s388 = smul.addr %s385, 2
        %s389 = sadd.s32 %s387, %s388
        %s390 = smul.addr %s389, 2
        %s391 = scalar_lea.vmem %s0, %s390
        %p392 = scmp.lt.s32.totalorder %s24, 1
        %s393 = scalar_select %p392, %s24, 1
        %s394 = smul.addr %s393, 2
        %s395 = smul.addr %s394, 4
        %s396 = scalar_lea.vmem %s1, %s395
        %p397 = scmp.lt.s32.totalorder %s24, 1
        %s398 = scalar_select %p397, %s24, 1
        %s399 = smul.addr %s398, 2
        %s400 = smul.addr %s399, 8
        %s401 = scalar_lea.vmem %s2, %s400
        %p402 = scmp.lt.s32.totalorder %s24, 1
        %s403 = scalar_select %p402, %s24, 1
        %s404 = smul.addr %s403, 4
        %s405 = smul.addr %s404, 4
        %s406 = scalar_lea.vmem %s3, %s405
        %p407 = scmp.lt.s32.totalorder %s24, 1
        %s408 = scalar_select %p407, %s24, 1
        %s409 = smul.addr %s408, 2
        %s410 = smul.addr %s409, 8
        %s411 = scalar_lea.vmem %s6, %s410
        %p412 = scmp.lt.s32.totalorder %s24, 1
        %s413 = scalar_select %p412, %s24, 1
        %s414 = smul.addr %s413, 4
        %s415 = smul.addr %s414, 8
        %s416 = scalar_lea.vmem %s7, %s415
        %p417 = scmp.lt.s32.totalorder %s24, 1
        %s418 = scalar_select %p417, %s24, 1
        %s419 = smul.addr %s418, 4
        %s420 = smul.addr %s419, 8
        %s421 = scalar_lea.vmem %s8, %s420
        %p423 = scmp.eq.s32.totalorder %s25, 0
        // Predicated region
        $region41: #{spatial_image_language_attention.1} parent=39 // pred_check
          %p424 = pneg %p423
        $region42: #{spatial_image_language_attention.1} parent=39 // pred_check_branch
          %426 = sbr.rel (%p424) target = $region44
        $region43: #{spatial_image_language_attention.1} parent=39 // pred_region
          %vm427 = vcmask 7168
          %428 = vst.msk [vmem:[%s411] sm:$0xff] %vm427, 0.0
          %429 = vst.msk [vmem:[%s411 + $0x8] sm:$0xff] %vm427, 0.0
          %430 = vst.msk [vmem:[%s416] sm:$0xff] %vm427, 0.0
          %431 = vst.msk [vmem:[%s416 + $0x8] sm:$0xff] %vm427, 0.0
          %432 = vst.msk [vmem:[%s416 + $0x10] sm:$0xff] %vm427, 0.0
          %433 = vst.msk [vmem:[%s416 + $0x18] sm:$0xff] %vm427, 0.0
          %434 = vst.msk [vmem:[%s421] sm:$0xff] %vm427, 0.0
          %435 = vst.msk [vmem:[%s421 + $0x8] sm:$0xff] %vm427, 0.0
          %436 = vst.msk [vmem:[%s421 + $0x10] sm:$0xff] %vm427, 0.0
          %437 = vst.msk [vmem:[%s421 + $0x18] sm:$0xff] %vm427, 0.0
        $region44: #{spatial_image_language_attention.1} parent=39 // pred_fallthru
          _
        %v438 = vld [vmem:[%s396] sm:$0xf]
        %v439 = vld [vmem:[%s396 + $0x4] sm:$0xf]
        %v440 = vld [vmem:[%s391] sm:$0x3]
        %v441 = vld [vmem:[%s401] sm:$0xff]
        %v442 = vld [vmem:[%s401 + $0x8] sm:$0xff]
        %444 = vset.pattern.permute.xlu0 0
        %445 = vperm.xlu0 %444, %v441
        %v446 = vpop.permute.xlu0 %445
        %449 = vset.pattern.permute.xlu0 0
        %450 = vperm.xlu0 %449, %v442
        %v451 = vpop.permute.xlu0 %450
        %v455 = vunpack.c.l.b16 %v438
        %v456 = vunpack.c.l.b16 %v439
        %v457 = vpack.c.b16 %v456, %v455
        %vm458 = vcmask 31744
        %v460 = vsel %vm458, %v457, 0
        %vm462 = vcmask 1041408
        %v464 = vsel %vm462, %v440, 0
        %466 = vmatprep.subr.bf16.mxu0 0
        %467 = vmatpush1.bf16.msra.mxu0 %v464
        %468 = vmatprep.subr.bf16.mxu0 0
        %469 = vmatpush1.bf16.msra.mxu0 0
        %470 = vmatprep.subr.bf16.mxu0 0
        %471 = vmatpush1.bf16.msra.mxu0 0
        %472 = vmatprep.subr.bf16.mxu0 0
        %473 = vmatpush1.bf16.msra.mxu0 0
        %474 = vmatprep.subr.bf16.mxu0 0
        %475 = vmatpush1.bf16.msra.mxu0 0
        %476 = vmatprep.subr.bf16.mxu0 0
        %477 = vmatpush1.bf16.msra.mxu0 0
        %478 = vmatprep.subr.bf16.mxu0 0
        %479 = vmatpush1.bf16.msra.mxu0 0
        %480 = vmatprep.subr.bf16.mxu0 0
        %481 = vmatpush1.bf16.msra.mxu0 0
        %482 = vmatprep.subr.bf16.mxu0 0
        %483 = vmatpush1.bf16.msra.mxu0 0
        %484 = vmatprep.subr.bf16.mxu0 0
        %485 = vmatpush1.bf16.msra.mxu0 0
        %486 = vmatprep.subr.bf16.mxu0 0
        %487 = vmatpush1.bf16.msra.mxu0 0
        %488 = vmatprep.subr.bf16.mxu0 0
        %489 = vmatpush1.bf16.msra.mxu0 0
        %490 = vmatprep.subr.bf16.mxu0 0
        %491 = vmatpush1.bf16.msra.mxu0 0
        %492 = vmatprep.subr.bf16.mxu0 0
        %493 = vmatpush1.bf16.msra.mxu0 0
        %494 = vmatprep.subr.bf16.mxu0 0
        %495 = vmatpush1.bf16.msra.mxu0 0
        %496 = vmatprep.subr.bf16.mxu0 0
        %497 = vmatpush1.bf16.msra.mxu0 0
        %498 = vmatprep.mubr.bf16.mxu0 0
        %499 = vmatmul.mubr.bf16.gmra.mrb[0].mxu0 %v460
        %v500 = vpop.f32.mrb[0].mxu0
        %v501 = vadd.f32 %v446, %v500
        %v502 = vpop.f32.mrb[0].mxu0
        %v503 = vpop.f32.mrb[0].mxu0
        %v504 = vadd.f32 %v451, %v503
        %v505 = vpop.f32.mrb[0].mxu0
        %506 = vdwg.mxu0
        %v507 = vrot.slane %v501, 4
        %v508 = vmax.f32 %v501, %v507
        %v509 = vrot.slane %v508, 2
        %v510 = vmax.f32 %v508, %v509
        %v511 = vrot.slane %v510, 1
        %v512 = vmax.f32 %v510, %v511
        %v513 = vrot.slane %v504, 4
        %v514 = vmax.f32 %v504, %v513
        %v515 = vrot.slane %v514, 2
        %v516 = vmax.f32 %v514, %v515
        %v517 = vrot.slane %v516, 1
        %v518 = vmax.f32 %v516, %v517
        %v519 = vsub.f32 %v501, %v512
        %v520 = vsub.f32 %v504, %v518
        %v521 = vmul.f32 %v519, 1.442695
        %v522 = vpow.pop %v521
        %v523 = vmul.f32 %v520, 1.442695
        %v524 = vpow.pop %v523
        %v525 = vrot.slane %v522, 4
        %v526 = vadd.f32 %v522, %v525
        %v527 = vrot.slane %v526, 2
        %v528 = vadd.f32 %v526, %v527
        %v529 = vrot.slane %v528, 1
        %v530 = vadd.f32 %v528, %v529
        %v531 = vrot.slane %v524, 4
        %v532 = vadd.f32 %v524, %v531
        %v533 = vrot.slane %v532, 2
        %v534 = vadd.f32 %v532, %v533
        %v535 = vrot.slane %v534, 1
        %v536 = vadd.f32 %v534, %v535
        %v537 = vrcp.pop %v530
        %v538 = vrcp.pop %v536
        %v539 = vmul.f32 %v522, %v537
        %v540 = vmul.f32 %v524, %v538
        %v541 = vld [vmem:[%s411] sm:$0xff]
        %v542 = vld [vmem:[%s411 + $0x8] sm:$0xff]
        %543 = vadd.xlane.f32.xlu0 %v539
        %v544 = vpop.xlane.xlu0 %543
        %545 = vadd.xlane.f32.xlu0 %v540
        %v546 = vpop.xlane.xlu0 %545
        %v547 = vadd.f32 %v541, %v544
        %v548 = vadd.f32 %v542, %v546
        %vm549 = vcmask 7168
        %550 = vst.msk [vmem:[%s411] sm:$0xff] %vm549, %v547
        %551 = vst.msk [vmem:[%s411 + $0x8] sm:$0xff] %vm549, %v548
        %v552 = vld [vmem:[%s406] sm:$0xf]
        %v553 = vld [vmem:[%s406 + $0x4] sm:$0xf]
        %v554 = vld [vmem:[%s406 + $0x8] sm:$0xf]
        %v555 = vld [vmem:[%s406 + $0xc] sm:$0xf]
        %v556 = vpack.c.bf16 %v540, %v539
        %v557 = vld [vmem:[%s4] sm:$0xff]
        %v558 = vld [vmem:[%s4 + $0x8] sm:$0xff]
        %v559 = vld [vmem:[%s4 + $0x10] sm:$0xff]
        %v560 = vld [vmem:[%s4 + $0x18] sm:$0xff]
        %562 = vset.pattern.permute.xlu0 0
        %563 = vperm.xlu0 %562, %v557
        %v564 = vpop.permute.xlu0 %563
        %567 = vset.pattern.permute.xlu0 0
        %568 = vperm.xlu0 %567, %v558
        %v569 = vpop.permute.xlu0 %568
        %572 = vset.pattern.permute.xlu0 0
        %573 = vperm.xlu0 %572, %v559
        %v574 = vpop.permute.xlu0 %573
        %577 = vset.pattern.permute.xlu0 0
        %578 = vperm.xlu0 %577, %v560
        %v579 = vpop.permute.xlu0 %578
        %v585 = vunpack.c.l.b16 %v552
        %v586 = vunpack.c.l.b16 %v553
        %v587 = vunpack.c.l.b16 %v554
        %v588 = vunpack.c.l.b16 %v555
        %v589 = vpack.c.b16 %v586, %v585
        %v590 = vpack.c.b16 %v588, %v587
        %vm591 = vcmask 130048
        %v593 = vsel %vm591, %v589, 0
        %v596 = vsel %vm591, %v590, 0
        %598 = vmatprep.subr.bf16.mxu0 0
        %599 = vmatpush1.bf16.msra.mxu0 %v556
        %600 = vmatprep.subr.bf16.mxu0 0
        %601 = vmatpush1.bf16.msra.mxu0 0
        %602 = vmatprep.subr.bf16.mxu0 0
        %603 = vmatpush1.bf16.msra.mxu0 0
        %604 = vmatprep.subr.bf16.mxu0 0
        %605 = vmatpush1.bf16.msra.mxu0 0
        %606 = vmatprep.subr.bf16.mxu0 0
        %607 = vmatpush1.bf16.msra.mxu0 0
        %608 = vmatprep.subr.bf16.mxu0 0
        %609 = vmatpush1.bf16.msra.mxu0 0
        %610 = vmatprep.subr.bf16.mxu0 0
        %611 = vmatpush1.bf16.msra.mxu0 0
        %612 = vmatprep.subr.bf16.mxu0 0
        %613 = vmatpush1.bf16.msra.mxu0 0
        %614 = vmatprep.subr.bf16.mxu0 0
        %615 = vmatpush1.bf16.msra.mxu0 0
        %616 = vmatprep.subr.bf16.mxu0 0
        %617 = vmatpush1.bf16.msra.mxu0 0
        %618 = vmatprep.subr.bf16.mxu0 0
        %619 = vmatpush1.bf16.msra.mxu0 0
        %620 = vmatprep.subr.bf16.mxu0 0
        %621 = vmatpush1.bf16.msra.mxu0 0
        %622 = vmatprep.subr.bf16.mxu0 0
        %623 = vmatpush1.bf16.msra.mxu0 0
        %624 = vmatprep.subr.bf16.mxu0 0
        %625 = vmatpush1.bf16.msra.mxu0 0
        %626 = vmatprep.subr.bf16.mxu0 0
        %627 = vmatpush1.bf16.msra.mxu0 0
        %628 = vmatprep.subr.bf16.mxu0 0
        %629 = vmatpush1.bf16.msra.mxu0 0
        %630 = vmatprep.mubr.bf16.mxu0 0
        %631 = vmatmul.mubr.bf16.gmra.mrb[0].mxu0 %v593
        %v632 = vpop.f32.mrb[0].mxu0
        %v633 = vadd.f32 %v564, %v632
        %v634 = vpop.f32.mrb[0].mxu0
        %v635 = vpop.f32.mrb[0].mxu0
        %v636 = vadd.f32 %v569, %v635
        %v637 = vpop.f32.mrb[0].mxu0
        %638 = vmatprep.mubr.bf16.mxu0 0
        %639 = vmatmul.mubr.bf16.gmra.mrb[0].mxu0 %v596
        %v640 = vpop.f32.mrb[0].mxu0
        %v641 = vadd.f32 %v574, %v640
        %v642 = vpop.f32.mrb[0].mxu0
        %v643 = vpop.f32.mrb[0].mxu0
        %v644 = vadd.f32 %v579, %v643
        %v645 = vpop.f32.mrb[0].mxu0
        %646 = vdwg.mxu0
        %647 = vst [vmem:[%s362] sm:$0xff] %v633
        %648 = vst [vmem:[%s362 + $0x8] sm:$0xff] %v636
        %649 = vst [vmem:[%s362 + $0x10] sm:$0xff] %v641
        %650 = vst [vmem:[%s362 + $0x18] sm:$0xff] %v644
        %v651 = vld [vmem:[%s416] sm:$0xff]
        %v652 = vld [vmem:[%s416 + $0x8] sm:$0xff]
        %v653 = vld [vmem:[%s416 + $0x10] sm:$0xff]
        %v654 = vld [vmem:[%s416 + $0x18] sm:$0xff]
        %655 = vadd.xlane.f32.xlu0 %v633
        %v656 = vpop.xlane.xlu0 %655
        %657 = vadd.xlane.f32.xlu0 %v636
        %v658 = vpop.xlane.xlu0 %657
        %659 = vadd.xlane.f32.xlu0 %v641
        %v660 = vpop.xlane.xlu0 %659
        %661 = vadd.xlane.f32.xlu0 %v644
        %v662 = vpop.xlane.xlu0 %661
        %v663 = vadd.f32 %v651, %v656
        %v664 = vadd.f32 %v652, %v658
        %v665 = vadd.f32 %v653, %v660
        %v666 = vadd.f32 %v654, %v662
        %667 = vst.msk [vmem:[%s416] sm:$0xff] %vm549, %v663
        %668 = vst.msk [vmem:[%s416 + $0x8] sm:$0xff] %vm549, %v664
        %669 = vst.msk [vmem:[%s416 + $0x10] sm:$0xff] %vm549, %v665
        %670 = vst.msk [vmem:[%s416 + $0x18] sm:$0xff] %vm549, %v666
        %v671 = vld [vmem:[%s421] sm:$0xff]
        %v672 = vld [vmem:[%s421 + $0x8] sm:$0xff]
        %v673 = vld [vmem:[%s421 + $0x10] sm:$0xff]
        %v674 = vld [vmem:[%s421 + $0x18] sm:$0xff]
        %v675 = vmul.f32 %v633, %v633
        %v676 = vmul.f32 %v636, %v636
        %v677 = vmul.f32 %v641, %v641
        %v678 = vmul.f32 %v644, %v644
        %679 = vadd.xlane.f32.xlu0 %v675
        %v680 = vpop.xlane.xlu0 %679
        %681 = vadd.xlane.f32.xlu0 %v676
        %v682 = vpop.xlane.xlu0 %681
        %683 = vadd.xlane.f32.xlu0 %v677
        %v684 = vpop.xlane.xlu0 %683
        %685 = vadd.xlane.f32.xlu0 %v678
        %v686 = vpop.xlane.xlu0 %685
        %v687 = vadd.f32 %v671, %v680
        %v688 = vadd.f32 %v672, %v682
        %v689 = vadd.f32 %v673, %v684
        %v690 = vadd.f32 %v674, %v686
        %691 = vst.msk [vmem:[%s421] sm:$0xff] %vm549, %v687
        %692 = vst.msk [vmem:[%s421 + $0x8] sm:$0xff] %vm549, %v688
        %693 = vst.msk [vmem:[%s421 + $0x10] sm:$0xff] %vm549, %v689
        %694 = vst.msk [vmem:[%s421 + $0x18] sm:$0xff] %vm549, %v690
        %s695 = sand.u32 %s169, 1
        %s696 = sand.u32 %s169, 1
        %s697 = smul.addr %s696, 32
        %s698 = scalar_lea.vmem [#allocation2], %s697
        %p699 = scmp.lt.s32.totalorder %s24, 1
        %s700 = scalar_select %p699, %s24, 1
        %s701 = smul.addr %s700, 2
        %s702 = smul.addr %s701, 8
        %s703 = scalar_lea.vmem %s6, %s702
        %p704 = scmp.lt.s32.totalorder %s24, 1
        %s705 = scalar_select %p704, %s24, 1
        %s706 = smul.addr %s705, 4
        %s707 = smul.addr %s706, 8
        %s708 = scalar_lea.vmem %s7, %s707
        %p709 = scmp.lt.s32.totalorder %s24, 1
        %s710 = scalar_select %p709, %s24, 1
        %s711 = smul.addr %s710, 4
        %s712 = smul.addr %s711, 8
        %s713 = scalar_lea.vmem %s8, %s712
        // Predicated region
        $region45: #{spatial_image_language_attention.1} parent=39 // pred_check
          %p714 = pneg %p179
        $region46: #{spatial_image_language_attention.1} parent=39 // pred_check_branch
          %716 = sbr.rel (%p714) target = $region48
        $region47: #{spatial_image_language_attention.1} parent=39 // pred_region
          %s717 = smul.addr %s24, 8
          %s718 = sadd.s32 %s25, %s717
          %s719 = smul.addr %s718, 8
          %s720 = scalar_lea.vmem %s5, %s719
          // Predicated region
          $region49: #{spatial_image_language_attention.1} parent=47 // pred_check
            _
          $region50: #{spatial_image_language_attention.1} parent=47 // pred_check_branch
            %722 = sbr.rel (0) target = $region52
          $region51: #{spatial_image_language_attention.1} parent=47 // pred_region
            // Predicated region
            $region53: #{spatial_image_language_attention.1} parent=51 // pred_check
              _
            $region54: #{spatial_image_language_attention.1} parent=51 // pred_check_branch
              %724 = sbr.rel (0) target = $region56
            $region55: #{spatial_image_language_attention.1} parent=51 // pred_region
              // Predicated region
              $region68: #{spatial_image_language_attention.1} parent=55 // pred_check
                _
              $region69: #{spatial_image_language_attention.1} parent=55 // pred_check_branch
                %745 = sbr.rel (0) target = $region71
              $region70: #{spatial_image_language_attention.1} parent=55 // pred_region
                loop: start=0, step=1, limit=1
                $region72: #{spatial_image_language_attention.1} parent=70 // loop_pre_header
                  _
                $region73: #{spatial_image_language_attention.1} parent=70 // loop_header
                  %s747 = sphi 0, %s751
                  %p748 = scmp.ge.s32.totalorder %s747, 1
                  %s752 = sphi %s698, %s698
                  %s753 = sphi %s720, %s720
                $region74: #{spatial_image_language_attention.1} parent=70 // loop_header_branch
                  %750 = sbr.rel (%p748) target = $region78
                $region75: #{spatial_image_language_attention.1} parent=70 // loop_body
                  %v754 = vld [vmem:[%s752] sm:$0xff]
                  %755 = vst [vmem:[%s753] sm:$0xff] %v754
                  %v756 = vld [vmem:[%s752 + $0x8] sm:$0xff]
                  %757 = vst [vmem:[%s753 + $0x10] sm:$0xff] %v756
                  %v758 = vld [vmem:[%s752 + $0x10] sm:$0xff]
                  %759 = vst [vmem:[%s753 + $0x20] sm:$0xff] %v758
                  %v760 = vld [vmem:[%s752 + $0x18] sm:$0xff]
                  %761 = vst [vmem:[%s753 + $0x30] sm:$0xff] %v760
                $region76: #{spatial_image_language_attention.1} parent=70 // loop_footer
                  %s751 = sadd.s32 1, %s747
                $region77: #{spatial_image_language_attention.1} parent=70 // loop_footer_branch
                  %746 = sbr.rel target = $region73
                $region78: #{spatial_image_language_attention.1} parent=70 // loop_exit
                  _
              $region71: #{spatial_image_language_attention.1} parent=55 // pred_fallthru
                _
              // Predicated region
              $region79: #{spatial_image_language_attention.1} parent=55 // pred_check
                _
              $region80: #{spatial_image_language_attention.1} parent=55 // pred_check_branch
                %763 = sbr.rel target = $region82
              $region81: #{spatial_image_language_attention.1} parent=55 // pred_region
                _
              $region82: #{spatial_image_language_attention.1} parent=55 // pred_fallthru
                _
            $region56: #{spatial_image_language_attention.1} parent=51 // pred_fallthru
              _
            // Predicated region
            $region57: #{spatial_image_language_attention.1} parent=51 // pred_check
              _
            $region58: #{spatial_image_language_attention.1} parent=51 // pred_check_branch
              %726 = sbr.rel target = $region60
            $region59: #{spatial_image_language_attention.1} parent=51 // pred_region
              loop: start=0, step=1, limit=1
              $region61: #{spatial_image_language_attention.1} parent=59 // loop_pre_header
                _
              $region62: #{spatial_image_language_attention.1} parent=59 // loop_header
                %s729 = sphi 0, %s733
                %p730 = scmp.ge.s32.totalorder %s729, 1
                %s734 = sphi %s698, %s698
                %s735 = sphi %s720, %s720
              $region63: #{spatial_image_language_attention.1} parent=59 // loop_header_branch
                %732 = sbr.rel (%p730) target = $region67
              $region64: #{spatial_image_language_attention.1} parent=59 // loop_body
                %v736 = vld [vmem:[%s734] sm:$0xff]
                %737 = vst [vmem:[%s735] sm:$0xff] %v736
                %v738 = vld [vmem:[%s734 + $0x8] sm:$0xff]
                %739 = vst [vmem:[%s735 + $0x10] sm:$0xff] %v738
                %v740 = vld [vmem:[%s734 + $0x10] sm:$0xff]
                %741 = vst [vmem:[%s735 + $0x20] sm:$0xff] %v740
                %v742 = vld [vmem:[%s734 + $0x18] sm:$0xff]
                %743 = vst [vmem:[%s735 + $0x30] sm:$0xff] %v742
              $region65: #{spatial_image_language_attention.1} parent=59 // loop_footer
                %s733 = sadd.s32 1, %s729
              $region66: #{spatial_image_language_attention.1} parent=59 // loop_footer_branch
                %728 = sbr.rel target = $region62
              $region67: #{spatial_image_language_attention.1} parent=59 // loop_exit
                _
            $region60: #{spatial_image_language_attention.1} parent=51 // pred_fallthru
              _
          $region52: #{spatial_image_language_attention.1} parent=47 // pred_fallthru
            _
          %764 = vnop
        $region48: #{spatial_image_language_attention.1} parent=39 // pred_fallthru
          _
        // Predicated region
        $region83: #{spatial_image_language_attention.1} parent=39 // pred_check
          %p765 = pneg %p205
        $region84: #{spatial_image_language_attention.1} parent=39 // pred_check_branch
          %767 = sbr.rel (%p765) target = $region86
        $region85: #{spatial_image_language_attention.1} parent=39 // pred_region
          _
        $region86: #{spatial_image_language_attention.1} parent=39 // pred_fallthru
          _
        // Predicated region
        $region87: #{spatial_image_language_attention.1} parent=39 // pred_check
          %p768 = pneg %p231
        $region88: #{spatial_image_language_attention.1} parent=39 // pred_check_branch
          %770 = sbr.rel (%p768) target = $region90
        $region89: #{spatial_image_language_attention.1} parent=39 // pred_region
          _
        $region90: #{spatial_image_language_attention.1} parent=39 // pred_fallthru
          _
        // Predicated region
        $region91: #{spatial_image_language_attention.1} parent=39 // pred_check
          %p771 = pneg %p257
        $region92: #{spatial_image_language_attention.1} parent=39 // pred_check_branch
          %773 = sbr.rel (%p771) target = $region94
        $region93: #{spatial_image_language_attention.1} parent=39 // pred_region
          _
        $region94: #{spatial_image_language_attention.1} parent=39 // pred_fallthru
          _
      $region40: #{spatial_image_language_attention.1} parent=5 // pred_fallthru
        _
      %p774 = scmp.le.s32.totalorder 2, %s15
      // Predicated region
      $region95: #{spatial_image_language_attention.1} parent=5 // pred_check
        %p775 = pneg %p774
      $region96: #{spatial_image_language_attention.1} parent=5 // pred_check_branch
        %777 = sbr.rel (%p775) target = $region98
      $region97: #{spatial_image_language_attention.1} parent=5 // pred_region
        %s778 = ssub.s32 %s15, 2
        // Predicated region
        $region99: #{spatial_image_language_attention.1} parent=97 // pred_check
          %p779 = pneg %p185
        $region100: #{spatial_image_language_attention.1} parent=97 // pred_check_branch
          %781 = sbr.rel (%p779) target = $region102
        $region101: #{spatial_image_language_attention.1} parent=97 // pred_region
          %s782 = sand.u32 %s170, 1
          %s783 = sand.u32 %s170, 1
          %s784 = smul.addr %s783, 32
          %s785 = scalar_lea.vmem [#allocation2], %s784
        $region102: #{spatial_image_language_attention.1} parent=97 // pred_fallthru
          _
        // Predicated region
        $region103: #{spatial_image_language_attention.1} parent=97 // pred_check
          %p786 = pneg %p211
        $region104: #{spatial_image_language_attention.1} parent=97 // pred_check_branch
          %788 = sbr.rel (%p786) target = $region106
        $region105: #{spatial_image_language_attention.1} parent=97 // pred_region
          %p789 = scmp.lt.s32.totalorder %s26, 1
          %s790 = scalar_select %p789, %s26, 1
          %s791 = smul.addr %s790, 2
          %s792 = smul.addr %s791, 8
          %s793 = scalar_lea.vmem %s6, %s792
        $region106: #{spatial_image_language_attention.1} parent=97 // pred_fallthru
          _
        // Predicated region
        $region107: #{spatial_image_language_attention.1} parent=97 // pred_check
          %p794 = pneg %p237
        $region108: #{spatial_image_language_attention.1} parent=97 // pred_check_branch
          %796 = sbr.rel (%p794) target = $region110
        $region109: #{spatial_image_language_attention.1} parent=97 // pred_region
          %p797 = scmp.lt.s32.totalorder %s26, 1
          %s798 = scalar_select %p797, %s26, 1
          %s799 = smul.addr %s798, 4
          %s800 = smul.addr %s799, 8
          %s801 = scalar_lea.vmem %s7, %s800
        $region110: #{spatial_image_language_attention.1} parent=97 // pred_fallthru
          _
        // Predicated region
        $region111: #{spatial_image_language_attention.1} parent=97 // pred_check
          %p802 = pneg %p263
        $region112: #{spatial_image_language_attention.1} parent=97 // pred_check_branch
          %804 = sbr.rel (%p802) target = $region114
        $region113: #{spatial_image_language_attention.1} parent=97 // pred_region
          %p805 = scmp.lt.s32.totalorder %s26, 1
          %s806 = scalar_select %p805, %s26, 1
          %s807 = smul.addr %s806, 4
          %s808 = smul.addr %s807, 8
          %s809 = scalar_lea.vmem %s8, %s808
        $region114: #{spatial_image_language_attention.1} parent=97 // pred_fallthru
          _
      $region98: #{spatial_image_language_attention.1} parent=5 // pred_fallthru
        _
    $region6: #{spatial_image_language_attention.1} parent=1 // loop_footer
      %s19 = sadd.s32 1, %s15
    $region7: #{spatial_image_language_attention.1} parent=1 // loop_footer_branch
      %14 = sbr.rel target = $region3
    $region8: #{spatial_image_language_attention.1} parent=1 // loop_exit
      _

</llo_original>
